<compile_context>
chip_gen: v6e
topology: v6e:2x2x1
jax: 0.10.0
libtpu: 0.0.40
codegen_flags: <defaults>
</compile_context>

<pallas_src>
import math

import jax
import jax.numpy as jnp
from jax.experimental import pallas as pl
from jax.experimental.pallas import tpu as pltpu

_LANE = 128
_TILE_BUDGET_BYTES = 8 * 1024 * 1024        # target bytes per output tile
_VMEM_LIMIT_BYTES = 48 * 1024 * 1024        # safe on v5e/v6e (128 MiB) and v7x (64 MiB/TC)
_PREBROADCAST_MAX_BYTES = 32 * 1024 * 1024  # cap on HBM cost of the pre-broadcast label


def _copy_broadcast_kernel(avg_ref, o_ref):
    # avg_ref: (tb_in, tn) pre-cast label tile.  In the common case tb_in == tb
    # and this is a plain full-width copy (broadcast_to is an identity); in the
    # very-large-label fallback tb_in == 1 and this is a cheap sublane replicate.
    # o_ref: (tb, tn) lane-dense output tile.
    o_ref[...] = jnp.broadcast_to(avg_ref[...], o_ref.shape)


def _sublane_multiple(itemsize: int) -> int:
    # Packed sublane layouts: f32 -> 8 rows / vreg, bf16 -> 16, int8/fp8 -> 32.
    return max(8, 8 * (4 // max(1, itemsize)))


def _round_up(x: int, m: int) -> int:
    return ((x + m - 1) // m) * m


def _pick_tiling(batch: int, chw: int, itemsize: int):
    """Pick (batch_tile, label_tile) sized against the VMEM budget."""
    sub = _sublane_multiple(itemsize)

    if sub * chw * itemsize > _TILE_BUDGET_BYTES:
        # Large label: tile the flattened label dim in 128-multiple chunks so a
        # single tile never blows the VMEM budget (worst on v7x's 64 MiB).
        tn = (_TILE_BUDGET_BYTES // (sub * itemsize)) // _LANE * _LANE
        tn = max(_LANE, min(tn, chw))
        tb = batch if batch <= sub else sub
        return tb, tn

    # Common case: full-width (lane-dense) tiles over the whole flattened label.
    tn = chw
    max_tb = max(sub, (_TILE_BUDGET_BYTES // (chw * itemsize)) // sub * sub)
    if max_tb >= batch:
        if batch >= 2 * sub:
            # Whole batch would fit in one tile: split into >=2 tiles so both
            # TensorCores participate on v7x (neutral on single-TC v5e/v6e).
            tb = _round_up((batch + 1) // 2, sub)
        else:
            tb = batch  # full dim (allowed even if not a multiple of 8)
    else:
        tb = max_tb     # multiple of the packed-sublane count, < batch
    return tb, tn


def avg_estimator_forward(x, avg_label):
    """Pallas equivalent of AvgEstimator.forward.

    x:         array whose shape[0] (batch) and dtype are used (values unread).
    avg_label: the cached average-label tensor (any rank >= 0).
    returns:   (batch, *avg_label.shape) array with dtype == x.dtype.
    """
    batch = x.shape[0]
    label_shape = tuple(avg_label.shape)
    chw = max(1, math.prod(label_shape))
    dtype = x.dtype

    if batch == 0:
        return jnp.zeros((0, *label_shape), dtype=dtype)

    itemsize = jnp.dtype(dtype).itemsize
    tb, tn = _pick_tiling(batch, chw, itemsize)

    # One-time cast + flatten in XLA (never per grid step inside the kernel).
    avg_flat = avg_label.astype(dtype).reshape(1, chw)

    # Pre-broadcast to a full tile of rows when cheap: the kernel body is then a
    # straight vld+vst copy and the (constant-index) input stays VMEM-resident.
    prebroadcast = tb * chw * itemsize <= _PREBROADCAST_MAX_BYTES
    if prebroadcast:
        avg_in = jnp.broadcast_to(avg_flat, (tb, chw))
        tb_in = tb
    else:
        avg_in = avg_flat
        tb_in = 1

    nb = pl.cdiv(batch, tb)
    nj = pl.cdiv(chw, tn)

    if nj == 1:
        grid = (nb,)
        in_index_map = lambda b: (0, 0)        # constant -> label resident in VMEM
        out_index_map = lambda b: (b, 0)
        dim_sems = ("parallel",)
    else:
        # Label-chunk axis outermost so the label block stays VMEM-resident
        # across the inner batch loop (one fetch per chunk, not per step).
        grid = (nj, nb)
        in_index_map = lambda j, b: (0, j)
        out_index_map = lambda j, b: (b, j)
        dim_sems = ("parallel", "parallel")

    def build(input_pipeline_mode):
        spec_kwargs = (
            {} if input_pipeline_mode is None
            else {"pipeline_mode": input_pipeline_mode}
        )
        in_spec = pl.BlockSpec((tb_in, tn), in_index_map, **spec_kwargs)
        return pl.pallas_call(
            _copy_broadcast_kernel,
            out_shape=jax.ShapeDtypeStruct((batch, chw), dtype),
            grid_spec=pltpu.PrefetchScalarGridSpec(
                num_scalar_prefetch=0,
                grid=grid,
                in_specs=[in_spec],
                # Lane-dense output tile: last dim is the full flattened label
                # (or a 128-multiple chunk of it) -> unmasked full-width stores.
                out_specs=pl.BlockSpec((tb, tn), out_index_map),
            ),
            compiler_params=pltpu.CompilerParams(
                dimension_semantics=dim_sems,
                vmem_limit_bytes=_VMEM_LIMIT_BYTES,
            ),
        )

    try:
        # Single-buffer the reused label input: its second pipeline buffer is
        # never used, saving a full tile of VMEM (relevant at large tb on v7x).
        out_flat = build(pl.Buffered(1))(avg_in)
    except Exception:  # pragma: no cover - fall back to default double-buffering
        out_flat = build(None)(avg_in)

    return out_flat.reshape((batch, *label_shape))


if __name__ == "__main__":
    key = jax.random.PRNGKey(0)
    k_avg, k_x = jax.random.split(key)

    # Deterministic stand-in for torch.load(.../avg.pth): a (C, H, W) tensor.
    # TODO(synk): file-based loading of avg.pth has no in-kernel equivalent; the
    # cached label is passed in as an array instead.
    C, H, W = 4, 16, 16
    avg_label = jax.random.normal(k_avg, (C, H, W), dtype=jnp.float32)

    # Example input x (NCHW); only its batch size and dtype are consumed.
    batch = 2
    x = jax.random.normal(k_x, (batch, C, H, W), dtype=jnp.bfloat16)

    out = avg_estimator_forward(x, avg_label)
    out = jax.block_until_ready(out)

    # Reference check: plain-JAX broadcast + cast.
    ref = jnp.broadcast_to(avg_label[None], (batch, C, H, W)).astype(x.dtype)
    assert out.shape == (batch, C, H, W)
    assert out.dtype == x.dtype
    assert jnp.array_equal(out, ref)

    print("KERNEL_OK")
</pallas_src>

<mosaic_0001>
module attributes {stable_mosaic.version = 11 : i64} {
  func.func @_copy_broadcast_kernel(%arg0: i32, %arg1: memref<2x1024xbf16, #tpu.memory_space<vmem>>, %arg2: memref<2x1024xbf16, #tpu.memory_space<vmem>>) attributes {dimension_semantics = [#tpu.dimension_semantics<parallel>], iteration_bounds = array<i64: 1>, scalar_prefetch = 0 : i64, scratch_operands = 0 : i64, tpu.core_type = #tpu.core_type<tc>, window_params = [{pipeline_mode = #tpu.pipeline_mode<synchronous>, transform_indices = @transform_0, window_bounds = array<i64: 2, 1024>}, {transform_indices = @transform_1, window_bounds = array<i64: 2, 1024>}]} {
    %c0 = arith.constant 0 : index
    %c0_0 = arith.constant 0 : index
    %0 = vector.load %arg1[%c0, %c0_0] : memref<2x1024xbf16, #tpu.memory_space<vmem>>, vector<2x1024xbf16>
    %c0_1 = arith.constant 0 : index
    %c0_2 = arith.constant 0 : index
    %1 = vector.load %arg2[%c0_1, %c0_2] : memref<2x1024xbf16, #tpu.memory_space<vmem>>, vector<2x1024xbf16>
    tpu.vector_store %arg2[%c0_1, %c0_2], %0 {strides = array<i32>} : memref<2x1024xbf16, #tpu.memory_space<vmem>>, vector<2x1024xbf16>,
    return
  }
  func.func @transform_0(%arg0: i32) -> (i32, i32) {
    %c0_i32 = arith.constant 0 : i32
    %c0_i32_0 = arith.constant 0 : i32
    %c0_i32_1 = arith.constant 0 : i32
    return %c0_i32, %c0_i32_0 : i32, i32
  }
  func.func @transform_1(%arg0: i32) -> (i32, i32) {
    %c0_i32 = arith.constant 0 : i32
    %c0_i32_0 = arith.constant 0 : i32
    return %arg0, %c0_i32 : i32, i32
  }
}

module attributes {stable_mosaic.version = 11 : i64} {
  func.func @_copy_broadcast_kernel(%arg0: i32, %arg1: memref<2x1024xbf16, #tpu.memory_space<vmem>>, %arg2: memref<2x1024xbf16, #tpu.memory_space<vmem>>) attributes {dimension_semantics = [#tpu.dimension_semantics<parallel>], iteration_bounds = array<i64: 1>, scalar_prefetch = 0 : i64, scratch_operands = 0 : i64, tpu.core_type = #tpu.core_type<tc>, window_params = [{pipeline_mode = #tpu.pipeline_mode<synchronous>, transform_indices = @transform_0, window_bounds = array<i64: 2, 1024>}, {transform_indices = @transform_1, window_bounds = array<i64: 2, 1024>}]} {
    %c0 = arith.constant 0 : index
    %c0_0 = arith.constant 0 : index
    %0 = vector.load %arg1[%c0, %c0_0] : memref<2x1024xbf16, #tpu.memory_space<vmem>>, vector<2x1024xbf16>
    %c0_1 = arith.constant 0 : index
    %c0_2 = arith.constant 0 : index
    %1 = vector.load %arg2[%c0_1, %c0_2] : memref<2x1024xbf16, #tpu.memory_space<vmem>>, vector<2x1024xbf16>
    tpu.vector_store %arg2[%c0_1, %c0_2], %0 {strides = array<i32>} : memref<2x1024xbf16, #tpu.memory_space<vmem>>, vector<2x1024xbf16>,
    return
  }
  func.func @transform_0(%arg0: i32) -> (i32, i32) {
    %c0_i32 = arith.constant 0 : i32
    %c0_i32_0 = arith.constant 0 : i32
    %c0_i32_1 = arith.constant 0 : i32
    return %c0_i32, %c0_i32_0 : i32, i32
  }
  func.func @transform_1(%arg0: i32) -> (i32, i32) {
    %c0_i32 = arith.constant 0 : i32
    %c0_i32_0 = arith.constant 0 : i32
    return %arg0, %c0_i32 : i32, i32
  }
}

</mosaic_0001>

<llo_original>
// kernel: tpu_custom_call.1
$region0: #{tpu_custom_call.1}
  #allocation0 [shape = 'u32[]', space=smem, size = 0x4, offset = 0x4, fixed_abs, tag = 'smem constant byte address 0x4 - core index']
  #allocation1 [shape = 'u32[144,128]{1,0:T(1,128)}', space=vmem, size = 0x12000, scoped, tag = 'internal scratch']
  %s0 = inlined_call_operand.hbm [shape: bf16[2,1024], index: 0, kind: input, shape index: {}]
  %s1 = inlined_call_operand.hbm [shape: bf16[2,1024], index: 1, kind: output, shape index: {}]
  %s2 = sld [smem:[#allocation0]]
  $region18: #{tpu_custom_call.1} parent=0
    _
  %s4 = ssub.s32 1, %s2
  %s5 = scalar_select 0, %s4, %s2
  $region1: #{tpu_custom_call.1} parent=0
    #allocation2 [shape = 'u8[4096]{0}', space=vmem, size = 0x1000, scoped, tag = 'input window, operand 0, single buffered']
    #allocation3 [shape = 's32[1]{0}', space=sflag, size = 0x4, scoped, tag = 'scoped memory for tpu_custom_call.1']
    #allocation4 [shape = 's32[1]{0}', space=sflag, size = 0x4, scoped, tag = 'scoped memory for tpu_custom_call.1']
    #allocation5 [shape = 'u8[4096]{0}', space=vmem, size = 0x1000, scoped, tag = 'output window, operand 0, single buffered']
    %6 = vsyncpa [#allocation3], 0
    %7 = vsyncpa [#allocation4], 0
    // Predicated region
    $region2: #{tpu_custom_call.1} parent=1 // pred_check
      _
    $region3: #{tpu_custom_call.1} parent=1 // pred_check_branch
      %9 = sbr.rel (0) target = $region5
    $region4: #{tpu_custom_call.1} parent=1 // pred_region
      %s11 = ssub.s32 128, 128
      %12 = vsyncadd [#allocation3], %s11
      %s14 = sshll.u32 [#allocation2], 4
      %s15 = int_to_ptr.vmem [resolvable:$true] %s14
      %17 = dma.hbm_to_vmem [thread:$0]  %s0, 128, %s15, [#allocation3]
    $region5: #{tpu_custom_call.1} parent=1 // pred_fallthru
      _
    // Predicated region
    $region6: #{tpu_custom_call.1} parent=1 // pred_check
      _
    $region7: #{tpu_custom_call.1} parent=1 // pred_check_branch
      %19 = sbr.rel (0) target = $region9
    $region8: #{tpu_custom_call.1} parent=1 // pred_region
      %20 = dma.done [#allocation3], 128
    $region9: #{tpu_custom_call.1} parent=1 // pred_fallthru
      _
    %v21 = vld [vmem:[#allocation2] sm:$0xff]
    %22 = vst [vmem:[#allocation5] sm:$0xff] %v21
    // Predicated region
    $region10: #{tpu_custom_call.1} parent=1 // pred_check
      _
    $region11: #{tpu_custom_call.1} parent=1 // pred_check_branch
      %24 = sbr.rel (0) target = $region13
    $region12: #{tpu_custom_call.1} parent=1 // pred_region
      %s26 = ssub.s32 128, 128
      %27 = vsyncadd [#allocation4], %s26
      %s29 = sshll.u32 [#allocation5], 4
      %s30 = int_to_ptr.vmem [resolvable:$true] %s29
      %32 = dma.vmem_to_hbm [thread:$0]  %s30, 128, %s1, [#allocation4]
    $region13: #{tpu_custom_call.1} parent=1 // pred_fallthru
      _
    // Predicated region
    $region14: #{tpu_custom_call.1} parent=1 // pred_check
      _
    $region15: #{tpu_custom_call.1} parent=1 // pred_check_branch
      %34 = sbr.rel (0) target = $region17
    $region16: #{tpu_custom_call.1} parent=1 // pred_region
      %35 = dma.done [#allocation4], 128
    $region17: #{tpu_custom_call.1} parent=1 // pred_fallthru
      _
    %36 = vsyncpa [#allocation3], 1
    %37 = vsyncpa [#allocation4], 1

// kernel: tpu_custom_call.1
$region0: #{tpu_custom_call.1}
  #allocation0 [shape = 'u32[]', space=smem, size = 0x4, offset = 0x4, fixed_abs, tag = 'smem constant byte address 0x4 - core index']
  #allocation1 [shape = 'u32[144,128]{1,0:T(1,128)}', space=vmem, size = 0x12000, scoped, tag = 'internal scratch']
  %s0 = inlined_call_operand.hbm [shape: bf16[2,1024], index: 0, kind: input, shape index: {}]
  %s1 = inlined_call_operand.hbm [shape: bf16[2,1024], index: 1, kind: output, shape index: {}]
  %s2 = sld [smem:[#allocation0]]
  $region18: #{tpu_custom_call.1} parent=0
    _
  %s4 = ssub.s32 1, %s2
  %s5 = scalar_select 0, %s4, %s2
  $region1: #{tpu_custom_call.1} parent=0
    #allocation2 [shape = 'u8[4096]{0}', space=vmem, size = 0x1000, scoped, tag = 'input window, operand 0, single buffered']
    #allocation3 [shape = 's32[1]{0}', space=sflag, size = 0x4, scoped, tag = 'scoped memory for tpu_custom_call.1']
    #allocation4 [shape = 's32[1]{0}', space=sflag, size = 0x4, scoped, tag = 'scoped memory for tpu_custom_call.1']
    #allocation5 [shape = 'u8[4096]{0}', space=vmem, size = 0x1000, scoped, tag = 'output window, operand 0, single buffered']
    %6 = vsyncpa [#allocation3], 0
    %7 = vsyncpa [#allocation4], 0
    // Predicated region
    $region2: #{tpu_custom_call.1} parent=1 // pred_check
      _
    $region3: #{tpu_custom_call.1} parent=1 // pred_check_branch
      %9 = sbr.rel (0) target = $region5
    $region4: #{tpu_custom_call.1} parent=1 // pred_region
      %s11 = ssub.s32 128, 128
      %12 = vsyncadd [#allocation3], %s11
      %s14 = sshll.u32 [#allocation2], 4
      %s15 = int_to_ptr.vmem [resolvable:$true] %s14
      %17 = dma.hbm_to_vmem [thread:$0]  %s0, 128, %s15, [#allocation3]
    $region5: #{tpu_custom_call.1} parent=1 // pred_fallthru
      _
    // Predicated region
    $region6: #{tpu_custom_call.1} parent=1 // pred_check
      _
    $region7: #{tpu_custom_call.1} parent=1 // pred_check_branch
      %19 = sbr.rel (0) target = $region9
    $region8: #{tpu_custom_call.1} parent=1 // pred_region
      %20 = dma.done [#allocation3], 128
    $region9: #{tpu_custom_call.1} parent=1 // pred_fallthru
      _
    %v21 = vld [vmem:[#allocation2] sm:$0xff]
    %22 = vst [vmem:[#allocation5] sm:$0xff] %v21
    // Predicated region
    $region10: #{tpu_custom_call.1} parent=1 // pred_check
      _
    $region11: #{tpu_custom_call.1} parent=1 // pred_check_branch
      %24 = sbr.rel (0) target = $region13
    $region12: #{tpu_custom_call.1} parent=1 // pred_region
      %s26 = ssub.s32 128, 128
      %27 = vsyncadd [#allocation4], %s26
      %s29 = sshll.u32 [#allocation5], 4
      %s30 = int_to_ptr.vmem [resolvable:$true] %s29
      %32 = dma.vmem_to_hbm [thread:$0]  %s30, 128, %s1, [#allocation4]
    $region13: #{tpu_custom_call.1} parent=1 // pred_fallthru
      _
    // Predicated region
    $region14: #{tpu_custom_call.1} parent=1 // pred_check
      _
    $region15: #{tpu_custom_call.1} parent=1 // pred_check_branch
      %34 = sbr.rel (0) target = $region17
    $region16: #{tpu_custom_call.1} parent=1 // pred_region
      %35 = dma.done [#allocation4], 128
    $region17: #{tpu_custom_call.1} parent=1 // pred_fallthru
      _
    %36 = vsyncpa [#allocation3], 1
    %37 = vsyncpa [#allocation4], 1

</llo_original>
